<compile_context>
chip_gen: v6e
topology: v6e:2x2x1
jax: 0.10.0
libtpu: 0.0.40
codegen_flags: <defaults>
</compile_context>

<pallas_src>
import functools

import numpy as np
import jax
import jax.numpy as jnp
from jax import lax
from jax.experimental import pallas as pl
from jax.experimental.pallas import tpu as pltpu


def _round_up(x, m):
    return ((x + m - 1) // m) * m


def _vmem_physical_bytes():
    """Physical VMEM per core (v5e/v6e: 128 MiB, v7x: 64 MiB); safe fallback."""
    try:
        info = pltpu.get_tpu_info()
        cap = getattr(info, "vmem_capacity_bytes", None)
        if cap:
            return int(cap)
    except Exception:
        pass
    return 128 * 1024 * 1024


# --------------------------------------------------------------------------
# Pallas kernel: K-tiled global Gram + rank-1 pair-weighted RBF-MMD finalize
# --------------------------------------------------------------------------
def _mmd_gram_kernel(z_ref, v_ref, o_ref, acc_ref, nrm_ref, *, sigmas, scale):
    k = pl.program_id(0)

    @pl.when(k == 0)
    def _init():
        acc_ref[...] = jnp.zeros_like(acc_ref)
        nrm_ref[...] = jnp.zeros_like(nrm_ref)

    z = z_ref[...]                                       # (Np, TILE) bf16
    zf = z.astype(jnp.float32)
    # f32 running squared norms (VPU/XLU filler on a DMA-bound loop); more
    # accurate than reading diag(G) of the bf16-operand Gram in the finalize.
    nrm_ref[...] += jnp.sum(zf * zf, axis=1, keepdims=True)
    # Gram accumulation over the feature (lane) axis: G += Zk @ Zk.T
    # (bf16 MXU operands, f32 accumulation in VMEM scratch).
    acc_ref[...] += lax.dot_general(
        z, z, (((1,), (1,)), ((), ())), preferred_element_type=jnp.float32)

    @pl.when(k == pl.num_programs(0) - 1)
    def _finalize():
        g = acc_ref[...]                                 # (Np, Np) f32
        npad = g.shape[0]
        nc = nrm_ref[...]                                # (Np, 1) f32 norms
        # Row-vector view of the norms via a one-shot masked reduce (runs once;
        # keeps f32 norms on both sides without a tiny-vector transpose).
        rows = lax.broadcasted_iota(jnp.int32, (npad, npad), 0)
        cols = lax.broadcasted_iota(jnp.int32, (npad, npad), 1)
        diag_n = jnp.where(rows == cols, jnp.broadcast_to(nc, (npad, npad)), 0.0)
        nr = jnp.sum(diag_n, axis=0, keepdims=True)      # (1, Np)
        # Squared pairwise distances; clamp fp-cancellation negatives.
        d = jnp.maximum(nc + nr - 2.0 * g, 0.0)

        v = v_ref[...]                                   # (Np, Ppad) signed pair weights
        total = jnp.zeros((1, 1), jnp.float32)
        for s in sigmas:                                 # static unroll over sigmas
            e = jnp.exp(jnp.float32(-1.0 / (2.0 * s)) * d)          # (Np, Np)
            # Rank-1 pair contraction on the MXU:
            #   v_p^T E v_p == kxx + kyy - 2*kxy   for all pairs at once.
            t = jnp.dot(e, v, preferred_element_type=jnp.float32)   # (Np, Ppad)
            pair_vals = jnp.sum(v * t, axis=0, keepdims=True)       # (1, Ppad)
            total = total + jnp.sum(jnp.abs(pair_vals), axis=1, keepdims=True)

        o_ref[...] = jnp.float32(scale) * total


# --------------------------------------------------------------------------
# MMDLoss.forward (default args: rbf kernel, normalize_per_channel=True,
# pooled=False) — env grouping on host; the hot path (Gram, distances, exp,
# pair contraction) in the fused Pallas kernel.
# --------------------------------------------------------------------------
def mmd_loss(env_label, latent, sigmas=(0.5, 1.5, 5.0), max_tile_d=None):
    env_label = np.asarray(env_label)
    if np.all(env_label == env_label[0]):
        return jnp.float32(0.0)

    n, c, h, w = latent.shape
    d = c * h * w
    n_pad = _round_up(max(n, 16), 16)                    # bf16: 16 sublanes / vreg

    # ---- host-side (static) signed per-pair weight vectors -----------------
    envs = np.unique(env_label)
    cols = []
    for a in range(len(envs)):
        idx_a = np.where(env_label == envs[a])[0]
        na = len(idx_a)
        for b in range(a + 1, len(envs)):
            idx_b = np.where(env_label == envs[b])[0]
            nb = len(idx_b)
            if na < 1 or nb < 1:
                continue
            col = np.zeros((n_pad,), np.float32)
            col[idx_a] = 1.0 / na
            col[idx_b] = -1.0 / nb
            cols.append(col)
    if not cols:
        return jnp.float32(0.0)
    num_pairs = len(cols)
    p_pad = _round_up(num_pairs, 128)                    # lane padding; zero cols inert
    v_np = np.zeros((n_pad, p_pad), np.float32)
    v_np[:, :num_pairs] = np.stack(cols, axis=1)
    v_mat = jnp.asarray(v_np)

    # ---- per-chip VMEM budget & Z K-tile sizing -----------------------------
    vmem_budget = int(0.75 * _vmem_physical_bytes())     # ~48 MiB v7x, ~96 MiB v5e/v6e
    d_pad128 = _round_up(d, 128)
    fixed_bytes = (n_pad * n_pad * 4                     # Gram accumulator
                   + n_pad * 128 * 4                     # norm accumulator (lane-padded)
                   + 2 * n_pad * p_pad * 4               # pair-weight input (tiny, 2-buf)
                   + 6 * n_pad * n_pad * 4)              # finalize temporaries (D, E, T)
    if 2 * n_pad * d_pad128 * 2 + fixed_bytes <= int(0.6 * vmem_budget):
        tile = d_pad128                                  # whole Z resident -> 1 grid step
    else:
        target_block_bytes = 1 << 20                     # ~1 MiB per (Np, tile) bf16 block
        tile = _round_up(
            min(d_pad128, max(128, target_block_bytes // (2 * n_pad))), 128)
    if max_tile_d is not None:                           # test override (forces K tiling)
        tile = _round_up(max(128, min(tile, int(max_tile_d))), 128)
    d_pad = _round_up(d, tile)
    num_k = d_pad // tile

    scale = 0.5 / d                                      # 0.5 / (channel * width * height)

    kernel = functools.partial(
        _mmd_gram_kernel,
        sigmas=tuple(float(s) for s in sigmas),
        scale=float(scale),
    )

    vmem_est = 2 * n_pad * tile * 2 + fixed_bytes        # double-buffered Z tile + fixed
    vmem_limit = int(min(max(2 * vmem_est, 16 * 1024 * 1024), vmem_budget))

    call = pl.pallas_call(
        kernel,
        out_shape=jax.ShapeDtypeStruct((1, 1), jnp.float32),
        grid_spec=pltpu.PrefetchScalarGridSpec(
            num_scalar_prefetch=0,
            grid=(num_k,),
            in_specs=[
                pl.BlockSpec((n_pad, tile), lambda k: (0, k)),
                # tiny (Np, Ppad) signed-weight matrix, constant across k
                pl.BlockSpec((n_pad, p_pad), lambda k: (0, 0)),
            ],
            out_specs=pl.BlockSpec((1, 1), lambda k: (0, 0)),
            scratch_shapes=[
                pltpu.VMEM((n_pad, n_pad), jnp.float32),   # Gram accumulator
                pltpu.VMEM((n_pad, 1), jnp.float32),       # f32 squared norms
            ],
        ),
        compiler_params=pltpu.CompilerParams(
            dimension_semantics=("arbitrary",),            # K is a reduction axis
            vmem_limit_bytes=vmem_limit,
        ),
        cost_estimate=pl.CostEstimate(
            flops=2 * n_pad * n_pad * d_pad
                  + 2 * len(sigmas) * n_pad * n_pad * p_pad,
            transcendentals=len(sigmas) * n_pad * n_pad,
            bytes_accessed=n_pad * d_pad * 2 + n_pad * p_pad * 4 + 4,
        ),
    )

    # Fuse normalize + flatten + pad + bf16 cast + kernel into one jitted
    # computation: the wrapper makes no extra materialized HBM passes over Z.
    def _run(lat, v):
        lat = lat.astype(jnp.float32)
        norm = jnp.sqrt(jnp.sum(lat * lat, axis=1, keepdims=True))
        lat = lat / jnp.maximum(norm, 1e-12)             # F.normalize(dim=1), eps=1e-12
        flat = lat.reshape(n, d)
        z = jnp.pad(flat, ((0, n_pad - n), (0, d_pad - d))).astype(jnp.bfloat16)
        return call(z, v)[0, 0]

    return jax.jit(_run)(latent, v_mat)


# --------------------------------------------------------------------------
# Pure-numpy reference mirroring the PyTorch module (default forward path)
# --------------------------------------------------------------------------
def _mmd_loss_ref(env_label, latent, sigmas=(0.5, 1.5, 5.0)):
    env_label = np.asarray(env_label)
    if np.all(env_label == env_label[0]):
        return np.float32(0.0)
    lat = np.asarray(latent, dtype=np.float32)
    n, c, h, w = lat.shape
    d = c * h * w
    norm = np.sqrt(np.sum(lat * lat, axis=1, keepdims=True))
    lat = lat / np.maximum(norm, 1e-12)
    flat = lat.reshape(n, -1)
    envs = np.unique(env_label)

    def pd(u, v):  # torch-style pairwise squared distances
        return np.sum((u[:, :, None] - v.T[None, :, :]) ** 2, axis=1)

    total = 0.0
    for a in range(len(envs)):
        for b in range(a + 1, len(envs)):
            xi = flat[env_label == envs[a]]
            yj = flat[env_label == envs[b]]
            for s in sigmas:
                beta = 1.0 / (2.0 * s)
                kxx = np.mean(np.exp(-beta * pd(xi, xi)))
                kyy = np.mean(np.exp(-beta * pd(yj, yj)))
                kxy = np.mean(np.exp(-beta * pd(xi, yj)))
                total += 0.5 / d * abs(kxx + kyy - 2.0 * kxy)
    return np.float32(total)


if __name__ == "__main__":
    key = jax.random.PRNGKey(0)
    batch, c, h, w = 8, 32, 4, 4                         # small NCHW latent, D = 512
    latent = jax.random.normal(key, (batch, c, h, w), dtype=jnp.float32)
    env_label = np.array([0, 0, 0, 1, 1, 2, 2, 2], dtype=np.int32)  # 3 envs -> 3 pairs

    ref = _mmd_loss_ref(env_label, np.asarray(latent))

    # Default path: budget-sized tile -> single K step (whole Z resident in VMEM).
    out_single = jax.block_until_ready(mmd_loss(env_label, latent))
    # Forced K tiling (2 grid steps) to exercise the Gram / norm accumulators.
    out_tiled = jax.block_until_ready(mmd_loss(env_label, latent, max_tile_d=256))

    for name, out in (("single", out_single), ("tiled", out_tiled)):
        if not np.allclose(np.asarray(out), ref, rtol=2e-2, atol=1e-6):
            raise AssertionError(f"Pallas/ref mismatch ({name}): {out} vs {ref}")
    print("KERNEL_OK")
</pallas_src>

<mosaic_0001>
module attributes {stable_mosaic.version = 11 : i64} {
  func.func @_mmd_gram_kernel(%arg0: i32, %arg1: memref<16x512xbf16, #tpu.memory_space<vmem>>, %arg2: memref<16x128xf32, #tpu.memory_space<vmem>>, %arg3: memref<1x1xf32, #tpu.memory_space<vmem>>, %arg4: memref<16x16xf32, #tpu.memory_space<vmem>>, %arg5: memref<16x1xf32, #tpu.memory_space<vmem>>) attributes {dimension_semantics = [#tpu.dimension_semantics<arbitrary>], iteration_bounds = array<i64: 1>, scalar_prefetch = 0 : i64, scratch_operands = 2 : i64, tpu.core_type = #tpu.core_type<tc>, window_params = [{transform_indices = @transform_0, window_bounds = array<i64: 16, 512>}, {pipeline_mode = #tpu.pipeline_mode<synchronous>, transform_indices = @transform_1, window_bounds = array<i64: 16, 128>}, {pipeline_mode = #tpu.pipeline_mode<synchronous>, transform_indices = @transform_2, window_bounds = array<i64: 1, 1>}]} {
    %c0_i32 = arith.constant 0 : i32
    %0 = arith.cmpi eq, %arg0, %c0_i32 : i32
    %1 = arith.extui %0 : i1 to i32
    %c0_i32_0 = arith.constant 0 : i32
    %2 = arith.cmpi ne, %1, %c0_i32_0 : i32
    scf.if %2 {
      %cst_13 = arith.constant 0.000000e+00 : f32
      %18 = vector.broadcast %cst_13 : f32 to vector<16x16xf32>
      %c0_14 = arith.constant 0 : index
      %c0_15 = arith.constant 0 : index
      %19 = vector.load %arg4[%c0_14, %c0_15] : memref<16x16xf32, #tpu.memory_space<vmem>>, vector<16x16xf32>
      tpu.vector_store %arg4[%c0_14, %c0_15], %18 {strides = array<i32>} : memref<16x16xf32, #tpu.memory_space<vmem>>, vector<16x16xf32>,
      %cst_16 = arith.constant 0.000000e+00 : f32
      %20 = vector.broadcast %cst_16 : f32 to vector<16x1xf32>
      %c0_17 = arith.constant 0 : index
      %c0_18 = arith.constant 0 : index
      %21 = vector.load %arg5[%c0_17, %c0_18] : memref<16x1xf32, #tpu.memory_space<vmem>>, vector<16x1xf32>
      tpu.vector_store %arg5[%c0_17, %c0_18], %20 {strides = array<i32>} : memref<16x1xf32, #tpu.memory_space<vmem>>, vector<16x1xf32>,
    } else {
    }
    %c0 = arith.constant 0 : index
    %c0_1 = arith.constant 0 : index
    %3 = vector.load %arg1[%c0, %c0_1] : memref<16x512xbf16, #tpu.memory_space<vmem>>, vector<16x512xbf16>
    %4 = arith.extf %3 : vector<16x512xbf16> to vector<16x512xf32>
    %c0_2 = arith.constant 0 : index
    %c0_3 = arith.constant 0 : index
    %5 = vector.load %arg5[%c0_2, %c0_3] : memref<16x1xf32, #tpu.memory_space<vmem>>, vector<16x1xf32>
    %6 = arith.mulf %4, %4 : vector<16x512xf32>
    %cst = arith.constant dense<0.000000e+00> : vector<16xf32>
    %7 = vector.multi_reduction <add>, %6, %cst [1] : vector<16x512xf32> to vector<16xf32>
    %8 = vector.shape_cast %7 : vector<16xf32> to vector<16x1xf32>
    %9 = arith.addf %5, %8 : vector<16x1xf32>
    %c0_4 = arith.constant 0 : index
    %c0_5 = arith.constant 0 : index
    %10 = vector.load %arg5[%c0_4, %c0_5] : memref<16x1xf32, #tpu.memory_space<vmem>>, vector<16x1xf32>
    tpu.vector_store %arg5[%c0_4, %c0_5], %9 {strides = array<i32>} : memref<16x1xf32, #tpu.memory_space<vmem>>, vector<16x1xf32>,
    %c0_6 = arith.constant 0 : index
    %c0_7 = arith.constant 0 : index
    %11 = vector.load %arg4[%c0_6, %c0_7] : memref<16x16xf32, #tpu.memory_space<vmem>>, vector<16x16xf32>
    %cst_8 = arith.constant dense<0.000000e+00> : vector<16x16xf32>
    %12 = tpu.matmul %3, %3, %cst_8 {dimension_numbers = #tpu.dot_dimension_numbers<[1], [1], [0], [0], [0, 0, 1, 0], [], []>} : vector<16x512xbf16>, vector<16x512xbf16>, vector<16x16xf32> -> vector<16x16xf32>
    %13 = arith.addf %11, %12 : vector<16x16xf32>
    %c0_9 = arith.constant 0 : index
    %c0_10 = arith.constant 0 : index
    %14 = vector.load %arg4[%c0_9, %c0_10] : memref<16x16xf32, #tpu.memory_space<vmem>>, vector<16x16xf32>
    tpu.vector_store %arg4[%c0_9, %c0_10], %13 {strides = array<i32>} : memref<16x16xf32, #tpu.memory_space<vmem>>, vector<16x16xf32>,
    %c0_i32_11 = arith.constant 0 : i32
    %15 = arith.cmpi eq, %arg0, %c0_i32_11 : i32
    %16 = arith.extui %15 : i1 to i32
    %c0_i32_12 = arith.constant 0 : i32
    %17 = arith.cmpi ne, %16, %c0_i32_12 : i32
    scf.if %17 {
      %c0_13 = arith.constant 0 : index
      %c0_14 = arith.constant 0 : index
      %18 = vector.load %arg4[%c0_13, %c0_14] : memref<16x16xf32, #tpu.memory_space<vmem>>, vector<16x16xf32>
      %c0_15 = arith.constant 0 : index
      %c0_16 = arith.constant 0 : index
      %19 = vector.load %arg5[%c0_15, %c0_16] : memref<16x1xf32, #tpu.memory_space<vmem>>, vector<16x1xf32>
      %20 = tpu.iota {dimensions = array<i32: 0>} : vector<16x16xi32>
      %21 = tpu.iota {dimensions = array<i32: 1>} : vector<16x16xi32>
      %22 = arith.cmpi eq, %20, %21 : vector<16x16xi32>
      %23 = vector.shape_cast %19 : vector<16x1xf32> to vector<16x1xf32>
      %24 = vector.broadcast %23 : vector<16x1xf32> to vector<16x16xf32>
      %cst_17 = arith.constant 0.000000e+00 : f32
      %25 = vector.broadcast %cst_17 : f32 to vector<16x16xf32>
      %26 = arith.select %22, %24, %25 : vector<16x16xi1>, vector<16x16xf32>
      %cst_18 = arith.constant dense<0.000000e+00> : vector<16xf32>
      %27 = vector.multi_reduction <add>, %26, %cst_18 [0] : vector<16x16xf32> to vector<16xf32>
      %28 = vector.shape_cast %27 : vector<16xf32> to vector<1x16xf32>
      %29 = vector.broadcast %19 : vector<16x1xf32> to vector<16x16xf32>
      %30 = vector.broadcast %28 : vector<1x16xf32> to vector<16x16xf32>
      %31 = arith.addf %29, %30 : vector<16x16xf32>
      %cst_19 = arith.constant 2.000000e+00 : f32
      %32 = vector.broadcast %cst_19 : f32 to vector<16x16xf32>
      %33 = arith.mulf %32, %18 : vector<16x16xf32>
      %34 = arith.subf %31, %33 : vector<16x16xf32>
      %cst_20 = arith.constant 0.000000e+00 : f32
      %35 = vector.broadcast %cst_20 : f32 to vector<16x16xf32>
      %36 = arith.maximumf %34, %35 : vector<16x16xf32>
      %c0_21 = arith.constant 0 : index
      %c0_22 = arith.constant 0 : index
      %37 = vector.load %arg2[%c0_21, %c0_22] : memref<16x128xf32, #tpu.memory_space<vmem>>, vector<16x128xf32>
      %cst_23 = arith.constant 0.000000e+00 : f32
      %38 = vector.broadcast %cst_23 : f32 to vector<1x1xf32>
      %cst_24 = arith.constant -1.000000e+00 : f32
      %39 = vector.broadcast %cst_24 : f32 to vector<16x16xf32>
      %40 = arith.mulf %39, %36 : vector<16x16xf32>
      %41 = math.exp %40 : vector<16x16xf32>
      %cst_25 = arith.constant dense<0.000000e+00> : vector<16x128xf32>
      %42 = tpu.matmul %41, %37, %cst_25 {dimension_numbers = #tpu.dot_dimension_numbers<[1], [0], [0], [1], [0, 0, 1, 1], [], []>} : vector<16x16xf32>, vector<16x128xf32>, vector<16x128xf32> -> vector<16x128xf32>
      %43 = arith.mulf %37, %42 : vector<16x128xf32>
      %cst_26 = arith.constant dense<0.000000e+00> : vector<128xf32>
      %44 = vector.multi_reduction <add>, %43, %cst_26 [0] : vector<16x128xf32> to vector<128xf32>
      %45 = vector.shape_cast %44 : vector<128xf32> to vector<1x128xf32>
      %46 = math.absf %45 : vector<1x128xf32>
      %cst_27 = arith.constant dense<0.000000e+00> : vector<1xf32>
      %47 = vector.multi_reduction <add>, %46, %cst_27 [1] : vector<1x128xf32> to vector<1xf32>
      %48 = vector.shape_cast %47 : vector<1xf32> to vector<1x1xf32>
      %49 = arith.addf %38, %48 : vector<1x1xf32>
      %cst_28 = arith.constant -0.333333343 : f32
      %50 = vector.broadcast %cst_28 : f32 to vector<16x16xf32>
      %51 = arith.mulf %50, %36 : vector<16x16xf32>
      %52 = math.exp %51 : vector<16x16xf32>
      %cst_29 = arith.constant dense<0.000000e+00> : vector<16x128xf32>
      %53 = tpu.matmul %52, %37, %cst_29 {dimension_numbers = #tpu.dot_dimension_numbers<[1], [0], [0], [1], [0, 0, 1, 1], [], []>} : vector<16x16xf32>, vector<16x128xf32>, vector<16x128xf32> -> vector<16x128xf32>
      %54 = arith.mulf %37, %53 : vector<16x128xf32>
      %cst_30 = arith.constant dense<0.000000e+00> : vector<128xf32>
      %55 = vector.multi_reduction <add>, %54, %cst_30 [0] : vector<16x128xf32> to vector<128xf32>
      %56 = vector.shape_cast %55 : vector<128xf32> to vector<1x128xf32>
      %57 = math.absf %56 : vector<1x128xf32>
      %cst_31 = arith.constant dense<0.000000e+00> : vector<1xf32>
      %58 = vector.multi_reduction <add>, %57, %cst_31 [1] : vector<1x128xf32> to vector<1xf32>
      %59 = vector.shape_cast %58 : vector<1xf32> to vector<1x1xf32>
      %60 = arith.addf %49, %59 : vector<1x1xf32>
      %cst_32 = arith.constant -1.000000e-01 : f32
      %61 = vector.broadcast %cst_32 : f32 to vector<16x16xf32>
      %62 = arith.mulf %61, %36 : vector<16x16xf32>
      %63 = math.exp %62 : vector<16x16xf32>
      %cst_33 = arith.constant dense<0.000000e+00> : vector<16x128xf32>
      %64 = tpu.matmul %63, %37, %cst_33 {dimension_numbers = #tpu.dot_dimension_numbers<[1], [0], [0], [1], [0, 0, 1, 1], [], []>} : vector<16x16xf32>, vector<16x128xf32>, vector<16x128xf32> -> vector<16x128xf32>
      %65 = arith.mulf %37, %64 : vector<16x128xf32>
      %cst_34 = arith.constant dense<0.000000e+00> : vector<128xf32>
      %66 = vector.multi_reduction <add>, %65, %cst_34 [0] : vector<16x128xf32> to vector<128xf32>
      %67 = vector.shape_cast %66 : vector<128xf32> to vector<1x128xf32>
      %68 = math.absf %67 : vector<1x128xf32>
      %cst_35 = arith.constant dense<0.000000e+00> : vector<1xf32>
      %69 = vector.multi_reduction <add>, %68, %cst_35 [1] : vector<1x128xf32> to vector<1xf32>
      %70 = vector.shape_cast %69 : vector<1xf32> to vector<1x1xf32>
      %71 = arith.addf %60, %70 : vector<1x1xf32>
      %cst_36 = arith.constant 9.765625E-4 : f32
      %72 = vector.broadcast %cst_36 : f32 to vector<1x1xf32>
      %73 = arith.mulf %72, %71 : vector<1x1xf32>
      %c0_37 = arith.constant 0 : index
      %c0_38 = arith.constant 0 : index
      %74 = vector.load %arg3[%c0_37, %c0_38] : memref<1x1xf32, #tpu.memory_space<vmem>>, vector<1x1xf32>
      tpu.vector_store %arg3[%c0_37, %c0_38], %73 {strides = array<i32>} : memref<1x1xf32, #tpu.memory_space<vmem>>, vector<1x1xf32>,
    } else {
    }
    return
  }
  func.func @transform_0(%arg0: i32) -> (i32, i32) {
    %c0_i32 = arith.constant 0 : i32
    %c0_i32_0 = arith.constant 0 : i32
    return %c0_i32, %arg0 : i32, i32
  }
  func.func @transform_1(%arg0: i32) -> (i32, i32) {
    %c0_i32 = arith.constant 0 : i32
    %c0_i32_0 = arith.constant 0 : i32
    %c0_i32_1 = arith.constant 0 : i32
    return %c0_i32, %c0_i32_0 : i32, i32
  }
  func.func @transform_2(%arg0: i32) -> (i32, i32) {
    %c0_i32 = arith.constant 0 : i32
    %c0_i32_0 = arith.constant 0 : i32
    %c0_i32_1 = arith.constant 0 : i32
    return %c0_i32, %c0_i32_0 : i32, i32
  }
}

</mosaic_0001>

<llo_original>
// kernel: _run.1
$region0: #{_run.1}
  #allocation0 [shape = 'u32[]', space=smem, size = 0x4, offset = 0x4, fixed_abs, tag = 'smem constant byte address 0x4 - core index']
  #allocation1 [shape = 'u32[144,128]{1,0:T(1,128)}', space=vmem, size = 0x12000, scoped, tag = 'internal scratch']
  #allocation2 [shape = 'f32[16,16]{1,0:T(8,128)}', space=vmem, size = 0x2000, scoped, tag = 'scratch operand']
  #allocation3 [shape = 'f32[16,1]{1,0:T(8,128)}', space=vmem, size = 0x2000, scoped, tag = 'scratch operand']
  %s0 = inlined_call_operand.vmem [shape: bf16[16,512], index: 0, kind: input, shape index: {}]
  %s1 = inlined_call_operand.vmem [shape: f32[16,128], index: 1, kind: input, shape index: {}]
  %s2 = inlined_call_operand.hbm [shape: f32[1,1], index: 2, kind: output, shape index: {}]
  %s3 = sld [smem:[#allocation0]]
  $region26: #{_run.1} parent=0
    _
  %s5 = ssub.s32 1, %s3
  %s6 = scalar_select 0, %s5, %s3
  $region1: #{_run.1} parent=0
    #allocation4 [shape = 'u8[512]{0}', space=vmem, size = 0x400, scoped, tag = 'output window, operand 0, single buffered']
    #allocation5 [shape = 's32[1]{0}', space=sflag, size = 0x4, scoped, tag = 'scoped memory for _run.1']
    %7 = vsyncpa [#allocation5], 0
    // Predicated region
    $region2: #{_run.1} parent=1 // pred_check
      _
    $region3: #{_run.1} parent=1 // pred_check_branch
      %9 = sbr.rel (0) target = $region5
    $region4: #{_run.1} parent=1 // pred_region
      _
    $region5: #{_run.1} parent=1 // pred_fallthru
      _
    // Predicated region
    $region6: #{_run.1} parent=1 // pred_check
      _
    $region7: #{_run.1} parent=1 // pred_check_branch
      %11 = sbr.rel (0) target = $region9
    $region8: #{_run.1} parent=1 // pred_region
      _
    $region9: #{_run.1} parent=1 // pred_fallthru
      _
    %p13 = scmp.eq.s32.totalorder 0, 0
    // Predicated region
    $region10: #{_run.1} parent=1 // pred_check
      %p14 = pneg %p13
    $region11: #{_run.1} parent=1 // pred_check_branch
      %16 = sbr.rel (%p14) target = $region13
    $region12: #{_run.1} parent=1 // pred_region
      %vm17 = vcmask 130048
      %18 = vst.msk [vmem:[#allocation2] sm:$0xff] %vm17, 0.0
      %19 = vst.msk [vmem:[#allocation2 + $0x8] sm:$0xff] %vm17, 0.0
      %vm20 = vcmask 7168
      %21 = vst.msk [vmem:[#allocation3] sm:$0xff] %vm20, 0.0
      %22 = vst.msk [vmem:[#allocation3 + $0x8] sm:$0xff] %vm20, 0.0
    $region13: #{_run.1} parent=1 // pred_fallthru
      _
    %v23 = vld [vmem:[%s0] sm:$0xff]
    %v24 = vld [vmem:[%s0 + $0x8] sm:$0xff]
    %v25 = vld [vmem:[%s0 + $0x10] sm:$0xff]
    %v26 = vld [vmem:[%s0 + $0x18] sm:$0xff]
    %v27 = vunpack.c.l.bf16 %v23
    %v28 = vunpack.c.h.bf16 %v23
    %v29 = vunpack.c.l.bf16 %v24
    %v30 = vunpack.c.h.bf16 %v24
    %v31 = vunpack.c.l.bf16 %v25
    %v32 = vunpack.c.h.bf16 %v25
    %v33 = vunpack.c.l.bf16 %v26
    %v34 = vunpack.c.h.bf16 %v26
    %v35 = vld [vmem:[#allocation3] sm:$0xff]
    %v36 = vld [vmem:[#allocation3 + $0x8] sm:$0xff]
    %v37 = vmul.f32 %v27, %v27
    %v38 = vmul.f32 %v28, %v28
    %v39 = vmul.f32 %v29, %v29
    %v40 = vmul.f32 %v30, %v30
    %v41 = vmul.f32 %v31, %v31
    %v42 = vmul.f32 %v32, %v32
    %v43 = vmul.f32 %v33, %v33
    %v44 = vmul.f32 %v34, %v34
    %v45 = vadd.f32 %v37, %v38
    %v46 = vadd.f32 %v45, %v39
    %v47 = vadd.f32 %v46, %v40
    %48 = vadd.xlane.f32.xlu0 %v47
    %v49 = vpop.xlane.xlu0 %48
    %v50 = vadd.f32 %v41, %v42
    %v51 = vadd.f32 %v50, %v43
    %v52 = vadd.f32 %v51, %v44
    %53 = vadd.xlane.f32.xlu0 %v52
    %v54 = vpop.xlane.xlu0 %53
    %v55 = vadd.f32 %v35, %v49
    %v56 = vadd.f32 %v36, %v54
    %vm57 = vcmask 7168
    %58 = vst.msk [vmem:[#allocation3] sm:$0xff] %vm57, %v55
    %59 = vst.msk [vmem:[#allocation3 + $0x8] sm:$0xff] %vm57, %v56
    %v60 = vld [vmem:[#allocation2] sm:$0xff]
    %v61 = vld [vmem:[#allocation2 + $0x8] sm:$0xff]
    %v66 = vunpack.c.l.b16 %v23
    %v67 = vunpack.c.h.b16 %v23
    %v68 = vunpack.c.l.b16 %v24
    %v69 = vunpack.c.h.b16 %v24
    %v70 = vunpack.c.l.b16 %v25
    %v71 = vunpack.c.h.b16 %v25
    %v72 = vunpack.c.l.b16 %v26
    %v73 = vunpack.c.h.b16 %v26
    %v74 = vpack.c.b16 %v70, %v66
    %v75 = vpack.c.b16 %v71, %v67
    %v76 = vpack.c.b16 %v72, %v68
    %v77 = vpack.c.b16 %v73, %v69
    %82 = vmatprep.subr.bf16.mxu0 0
    %83 = vmatpush1.bf16.xpose.msra.mxu0 0
    %84 = vmatprep.subr.bf16.mxu0 0
    %85 = vmatpush1.bf16.xpose.msra.mxu0 0
    %86 = vmatprep.subr.bf16.mxu0 0
    %87 = vmatpush1.bf16.xpose.msra.mxu0 0
    %88 = vmatprep.subr.bf16.mxu0 0
    %89 = vmatpush1.bf16.xpose.msra.mxu0 0
    %90 = vmatprep.subr.bf16.mxu0 0
    %91 = vmatpush1.bf16.xpose.msra.mxu0 0
    %92 = vmatprep.subr.bf16.mxu0 0
    %93 = vmatpush1.bf16.xpose.msra.mxu0 0
    %94 = vmatprep.subr.bf16.mxu0 0
    %95 = vmatpush1.bf16.xpose.msra.mxu0 0
    %96 = vmatprep.subr.bf16.mxu0 %v75
    %97 = vmatpush1.bf16.xpose.msra.mxu0 %v74
    %98 = vmatprep.subr.bf16.mxu0 0
    %99 = vmatpush2.bf16.xpose.msra.mxu0 0
    %100 = vmatprep.subr.bf16.mxu0 0
    %101 = vmatpush2.bf16.xpose.msra.mxu0 0
    %102 = vmatprep.subr.bf16.mxu0 0
    %103 = vmatpush2.bf16.xpose.msra.mxu0 0
    %104 = vmatprep.subr.bf16.mxu0 0
    %105 = vmatpush2.bf16.xpose.msra.mxu0 0
    %106 = vmatprep.subr.bf16.mxu0 0
    %107 = vmatpush2.bf16.xpose.msra.mxu0 0
    %108 = vmatprep.subr.bf16.mxu0 0
    %109 = vmatpush2.bf16.xpose.msra.mxu0 0
    %110 = vmatprep.subr.bf16.mxu0 0
    %111 = vmatpush2.bf16.xpose.msra.mxu0 0
    %112 = vmatprep.subr.bf16.mxu0 0
    %113 = vmatpush2.bf16.xpose.msra.mxu0 0
    %114 = vmatprep.mubr.bf16.mxu0 %v75
    %115 = vmatmul.mubr.bf16.gmra.mxu0 %v74
    %v116 = vpop.f32.mrf.mxu0
    %v117 = vadd.f32 0.0, %v116
    %v118 = vpop.f32.mrf.mxu0
    %v119 = vpop.f32.mrf.mxu0
    %v120 = vadd.f32 0.0, %v119
    %v121 = vpop.f32.mrf.mxu0
    %122 = vdwg.mxu0
    %123 = vmatprep.subr.bf16.mxu0 0
    %124 = vmatpush1.bf16.xpose.msra.mxu0 0
    %125 = vmatprep.subr.bf16.mxu0 0
    %126 = vmatpush1.bf16.xpose.msra.mxu0 0
    %127 = vmatprep.subr.bf16.mxu0 0
    %128 = vmatpush1.bf16.xpose.msra.mxu0 0
    %129 = vmatprep.subr.bf16.mxu0 0
    %130 = vmatpush1.bf16.xpose.msra.mxu0 0
    %131 = vmatprep.subr.bf16.mxu0 0
    %132 = vmatpush1.bf16.xpose.msra.mxu0 0
    %133 = vmatprep.subr.bf16.mxu0 0
    %134 = vmatpush1.bf16.xpose.msra.mxu0 0
    %135 = vmatprep.subr.bf16.mxu0 0
    %136 = vmatpush1.bf16.xpose.msra.mxu0 0
    %137 = vmatprep.subr.bf16.mxu0 %v77
    %138 = vmatpush1.bf16.xpose.msra.mxu0 %v76
    %139 = vmatprep.subr.bf16.mxu0 0
    %140 = vmatpush2.bf16.xpose.msra.mxu0 0
    %141 = vmatprep.subr.bf16.mxu0 0
    %142 = vmatpush2.bf16.xpose.msra.mxu0 0
    %143 = vmatprep.subr.bf16.mxu0 0
    %144 = vmatpush2.bf16.xpose.msra.mxu0 0
    %145 = vmatprep.subr.bf16.mxu0 0
    %146 = vmatpush2.bf16.xpose.msra.mxu0 0
    %147 = vmatprep.subr.bf16.mxu0 0
    %148 = vmatpush2.bf16.xpose.msra.mxu0 0
    %149 = vmatprep.subr.bf16.mxu0 0
    %150 = vmatpush2.bf16.xpose.msra.mxu0 0
    %151 = vmatprep.subr.bf16.mxu0 0
    %152 = vmatpush2.bf16.xpose.msra.mxu0 0
    %153 = vmatprep.subr.bf16.mxu0 0
    %154 = vmatpush2.bf16.xpose.msra.mxu0 0
    %155 = vmatprep.mubr.bf16.mxu0 %v77
    %156 = vmatmul.mubr.bf16.gmra.mxu0 %v76
    %v157 = vpop.f32.mrf.mxu0
    %v158 = vadd.f32 %v117, %v157
    %v159 = vpop.f32.mrf.mxu0
    %v160 = vpop.f32.mrf.mxu0
    %v161 = vadd.f32 %v120, %v160
    %v162 = vpop.f32.mrf.mxu0
    %163 = vdwg.mxu0
    %v164 = vadd.f32 %v60, %v158
    %v165 = vadd.f32 %v61, %v161
    %vm166 = vcmask 130048
    %167 = vst.msk [vmem:[#allocation2] sm:$0xff] %vm166, %v164
    %168 = vst.msk [vmem:[#allocation2 + $0x8] sm:$0xff] %vm166, %v165
    // Predicated region
    $region14: #{_run.1} parent=1 // pred_check
      %p169 = pneg %p13
    $region15: #{_run.1} parent=1 // pred_check_branch
      %171 = sbr.rel (%p169) target = $region17
    $region16: #{_run.1} parent=1 // pred_region
      %v172 = vld [vmem:[#allocation2] sm:$0xff]
      %v173 = vld [vmem:[#allocation2 + $0x8] sm:$0xff]
      %v174 = vld [vmem:[#allocation3] sm:$0xff]
      %v175 = vld [vmem:[#allocation3 + $0x8] sm:$0xff]
      %v176 = vlaneseq
      %v177 = vshrl.u32 %v176, 7
      %v178 = vadd.s32 %v177, 8
      %v179 = vlaneseq
      %v180 = vand.u32 %v179, 127
      %vm181 = vcmp.eq.s32.totalorder %v177, %v180
      %vm182 = vcmp.eq.s32.totalorder %v178, %v180
      %184 = vset.pattern.permute.xlu0 0
      %185 = vperm.xlu0 %184, %v174
      %v186 = vpop.permute.xlu0 %185
      %189 = vset.pattern.permute.xlu0 0
      %190 = vperm.xlu0 %189, %v175
      %v191 = vpop.permute.xlu0 %190
      %v193 = vsel %vm181, %v186, 0.0
      %v194 = vsel %vm182, %v191, 0.0
      %v195 = vsel %vm166, %v193, 0.0
      %v196 = vsel %vm166, %v194, 0.0
      %v197 = vadd.f32 %v195, %v196
      %v198 = vrot.slane %v197, 4
      %v199 = vadd.f32 %v197, %v198
      %v200 = vrot.slane %v199, 2
      %v201 = vadd.f32 %v199, %v200
      %v202 = vrot.slane %v201, 1
      %v203 = vadd.f32 %v201, %v202
      %v204 = vadd.f32 %v186, %v203
      %v205 = vadd.f32 %v191, %v203
      %v206 = vmul.f32 %v172, 2.0
      %v207 = vmul.f32 %v173, 2.0
      %v208 = vsub.f32 %v204, %v206
      %v209 = vsub.f32 %v205, %v207
      %v210 = vmax.f32 %v208, 0.0
      %v211 = vmax.f32 %v209, 0.0
      %v212 = vld [vmem:[%s1] sm:$0xff]
      %v213 = vld [vmem:[%s1 + $0x8] sm:$0xff]
      %v214 = vmul.f32 %v210, -1.0
      %v215 = vmul.f32 %v211, -1.0
      %v216 = vmul.f32 %v214, 1.442695
      %v217 = vpow.pop %v216
      %v218 = vmul.f32 %v215, 1.442695
      %v219 = vpow.pop %v218
      %v221 = vsel %vm166, %v217, 0
      %v224 = vsel %vm166, %v219, 0
      %226 = vmatprep.subr.mxu0 0.0
      %227 = vmatpush1.msra.mxu0 0.0
      %228 = vmatprep.subr.mxu0 0.0
      %229 = vmatpush1.msra.mxu0 0.0
      %230 = vmatprep.subr.mxu0 0.0
      %231 = vmatpush1.msra.mxu0 0.0
      %232 = vmatprep.subr.mxu0 0.0
      %233 = vmatpush1.msra.mxu0 0.0
      %234 = vmatprep.subr.mxu0 0.0
      %235 = vmatpush1.msra.mxu0 0.0
      %236 = vmatprep.subr.mxu0 0.0
      %237 = vmatpush1.msra.mxu0 0.0
      %238 = vmatprep.subr.mxu0 0.0
      %239 = vmatpush1.msra.mxu0 0.0
      %240 = vmatprep.subr.mxu0 0.0
      %241 = vmatpush1.msra.mxu0 0.0
      %242 = vmatprep.subr.mxu0 0.0
      %243 = vmatpush1.msra.mxu0 0.0
      %244 = vmatprep.subr.mxu0 0.0
      %245 = vmatpush1.msra.mxu0 0.0
      %246 = vmatprep.subr.mxu0 0.0
      %247 = vmatpush1.msra.mxu0 0.0
      %248 = vmatprep.subr.mxu0 0.0
      %249 = vmatpush1.msra.mxu0 0.0
      %250 = vmatprep.subr.mxu0 0.0
      %251 = vmatpush1.msra.mxu0 0.0
      %252 = vmatprep.subr.mxu0 0.0
      %253 = vmatpush1.msra.mxu0 0.0
      %254 = vmatprep.subr.mxu0 0.0
      %255 = vmatpush1.msra.mxu0 %v213
      %256 = vmatprep.subr.mxu0 0.0
      %257 = vmatpush1.msra.mxu0 %v212
      %258 = vmatprep.subr.mxu0 0.0
      %259 = vmatpush2.msra.mxu0 0.0
      %260 = vmatprep.subr.mxu0 0.0
      %261 = vmatpush2.msra.mxu0 0.0
      %262 = vmatprep.subr.mxu0 0.0
      %263 = vmatpush2.msra.mxu0 0.0
      %264 = vmatprep.subr.mxu0 0.0
      %265 = vmatpush2.msra.mxu0 0.0
      %266 = vmatprep.subr.mxu0 0.0
      %267 = vmatpush2.msra.mxu0 0.0
      %268 = vmatprep.subr.mxu0 0.0
      %269 = vmatpush2.msra.mxu0 0.0
      %270 = vmatprep.subr.mxu0 0.0
      %271 = vmatpush2.msra.mxu0 0.0
      %272 = vmatprep.subr.mxu0 0.0
      %273 = vmatpush2.msra.mxu0 0.0
      %274 = vmatprep.subr.mxu0 0.0
      %275 = vmatpush2.msra.mxu0 0.0
      %276 = vmatprep.subr.mxu0 0.0
      %277 = vmatpush2.msra.mxu0 0.0
      %278 = vmatprep.subr.mxu0 0.0
      %279 = vmatpush2.msra.mxu0 0.0
      %280 = vmatprep.subr.mxu0 0.0
      %281 = vmatpush2.msra.mxu0 0.0
      %282 = vmatprep.subr.mxu0 0.0
      %283 = vmatpush2.msra.mxu0 0.0
      %284 = vmatprep.subr.mxu0 0.0
      %285 = vmatpush2.msra.mxu0 0.0
      %286 = vmatprep.subr.mxu0 0.0
      %287 = vmatpush2.msra.mxu0 0.0
      %288 = vmatprep.subr.mxu0 0.0
      %289 = vmatpush2.msra.mxu0 0.0
      %290 = vmatprep.mubr.f32.mxu0 0.0
      %291 = vmatmul.mubr.f32.gmra.mxu0 %v221
      %v292 = vpop.f32.mrf.mxu0
      %v293 = vadd.f32 0.0, %v292
      %v294 = vpop.f32.mrf.mxu0
      %295 = vmatprep.mubr.f32.mxu0 0.0
      %296 = vmatmul.mubr.f32.gmra.mxu0 %v224
      %v297 = vpop.f32.mrf.mxu0
      %v298 = vadd.f32 0.0, %v297
      %v299 = vpop.f32.mrf.mxu0
      %300 = vdwg.mxu0
      %v301 = vmul.f32 %v212, %v293
      %v302 = vmul.f32 %v213, %v298
      %v303 = vadd.f32 %v301, %v302
      %v304 = vrot.slane %v303, 4
      %v305 = vadd.f32 %v303, %v304
      %v306 = vrot.slane %v305, 2
      %v307 = vadd.f32 %v305, %v306
      %v308 = vrot.slane %v307, 1
      %v309 = vadd.f32 %v307, %v308
      %v310 = vand.u32 2147483647, %v309
      %311 = vadd.xlane.f32.xlu0 %v310
      %v312 = vpop.xlane.xlu0 %311
      %v313 = vadd.f32 %v312, 0.0
      %v314 = vmul.f32 %v210, -0.33333334
      %v315 = vmul.f32 %v211, -0.33333334
      %v316 = vmul.f32 %v314, 1.442695
      %v317 = vpow.pop %v316
      %v318 = vmul.f32 %v315, 1.442695
      %v319 = vpow.pop %v318
      %v321 = vsel %vm166, %v317, 0
      %v324 = vsel %vm166, %v319, 0
      %326 = vmatprep.subr.mxu0 0.0
      %327 = vmatpush1.msra.mxu0 0.0
      %328 = vmatprep.subr.mxu0 0.0
      %329 = vmatpush1.msra.mxu0 0.0
      %330 = vmatprep.subr.mxu0 0.0
      %331 = vmatpush1.msra.mxu0 0.0
      %332 = vmatprep.subr.mxu0 0.0
      %333 = vmatpush1.msra.mxu0 0.0
      %334 = vmatprep.subr.mxu0 0.0
      %335 = vmatpush1.msra.mxu0 0.0
      %336 = vmatprep.subr.mxu0 0.0
      %337 = vmatpush1.msra.mxu0 0.0
      %338 = vmatprep.subr.mxu0 0.0
      %339 = vmatpush1.msra.mxu0 0.0
      %340 = vmatprep.subr.mxu0 0.0
      %341 = vmatpush1.msra.mxu0 0.0
      %342 = vmatprep.subr.mxu0 0.0
      %343 = vmatpush1.msra.mxu0 0.0
      %344 = vmatprep.subr.mxu0 0.0
      %345 = vmatpush1.msra.mxu0 0.0
      %346 = vmatprep.subr.mxu0 0.0
      %347 = vmatpush1.msra.mxu0 0.0
      %348 = vmatprep.subr.mxu0 0.0
      %349 = vmatpush1.msra.mxu0 0.0
      %350 = vmatprep.subr.mxu0 0.0
      %351 = vmatpush1.msra.mxu0 0.0
      %352 = vmatprep.subr.mxu0 0.0
      %353 = vmatpush1.msra.mxu0 0.0
      %354 = vmatprep.subr.mxu0 0.0
      %355 = vmatpush1.msra.mxu0 %v213
      %356 = vmatprep.subr.mxu0 0.0
      %357 = vmatpush1.msra.mxu0 %v212
      %358 = vmatprep.subr.mxu0 0.0
      %359 = vmatpush2.msra.mxu0 0.0
      %360 = vmatprep.subr.mxu0 0.0
      %361 = vmatpush2.msra.mxu0 0.0
      %362 = vmatprep.subr.mxu0 0.0
      %363 = vmatpush2.msra.mxu0 0.0
      %364 = vmatprep.subr.mxu0 0.0
      %365 = vmatpush2.msra.mxu0 0.0
      %366 = vmatprep.subr.mxu0 0.0
      %367 = vmatpush2.msra.mxu0 0.0
      %368 = vmatprep.subr.mxu0 0.0
      %369 = vmatpush2.msra.mxu0 0.0
      %370 = vmatprep.subr.mxu0 0.0
      %371 = vmatpush2.msra.mxu0 0.0
      %372 = vmatprep.subr.mxu0 0.0
      %373 = vmatpush2.msra.mxu0 0.0
      %374 = vmatprep.subr.mxu0 0.0
      %375 = vmatpush2.msra.mxu0 0.0
      %376 = vmatprep.subr.mxu0 0.0
      %377 = vmatpush2.msra.mxu0 0.0
      %378 = vmatprep.subr.mxu0 0.0
      %379 = vmatpush2.msra.mxu0 0.0
      %380 = vmatprep.subr.mxu0 0.0
      %381 = vmatpush2.msra.mxu0 0.0
      %382 = vmatprep.subr.mxu0 0.0
      %383 = vmatpush2.msra.mxu0 0.0
      %384 = vmatprep.subr.mxu0 0.0
      %385 = vmatpush2.msra.mxu0 0.0
      %386 = vmatprep.subr.mxu0 0.0
      %387 = vmatpush2.msra.mxu0 0.0
      %388 = vmatprep.subr.mxu0 0.0
      %389 = vmatpush2.msra.mxu0 0.0
      %390 = vmatprep.mubr.f32.mxu0 0.0
      %391 = vmatmul.mubr.f32.gmra.mxu0 %v321
      %v392 = vpop.f32.mrf.mxu0
      %v393 = vadd.f32 0.0, %v392
      %v394 = vpop.f32.mrf.mxu0
      %395 = vmatprep.mubr.f32.mxu0 0.0
      %396 = vmatmul.mubr.f32.gmra.mxu0 %v324
      %v397 = vpop.f32.mrf.mxu0
      %v398 = vadd.f32 0.0, %v397
      %v399 = vpop.f32.mrf.mxu0
      %400 = vdwg.mxu0
      %v401 = vmul.f32 %v212, %v393
      %v402 = vmul.f32 %v213, %v398
      %v403 = vadd.f32 %v401, %v402
      %v404 = vrot.slane %v403, 4
      %v405 = vadd.f32 %v403, %v404
      %v406 = vrot.slane %v405, 2
      %v407 = vadd.f32 %v405, %v406
      %v408 = vrot.slane %v407, 1
      %v409 = vadd.f32 %v407, %v408
      %v410 = vand.u32 2147483647, %v409
      %411 = vadd.xlane.f32.xlu0 %v410
      %v412 = vpop.xlane.xlu0 %411
      %v413 = vadd.f32 %v313, %v412
      %v414 = vmul.f32 %v210, -0.1
      %v415 = vmul.f32 %v211, -0.1
      %v416 = vmul.f32 %v414, 1.442695
      %v417 = vpow.pop %v416
      %v418 = vmul.f32 %v415, 1.442695
      %v419 = vpow.pop %v418
      %v421 = vsel %vm166, %v417, 0
      %v424 = vsel %vm166, %v419, 0
      %426 = vmatprep.subr.mxu0 0.0
      %427 = vmatpush1.msra.mxu0 0.0
      %428 = vmatprep.subr.mxu0 0.0
      %429 = vmatpush1.msra.mxu0 0.0
      %430 = vmatprep.subr.mxu0 0.0
      %431 = vmatpush1.msra.mxu0 0.0
      %432 = vmatprep.subr.mxu0 0.0
      %433 = vmatpush1.msra.mxu0 0.0
      %434 = vmatprep.subr.mxu0 0.0
      %435 = vmatpush1.msra.mxu0 0.0
      %436 = vmatprep.subr.mxu0 0.0
      %437 = vmatpush1.msra.mxu0 0.0
      %438 = vmatprep.subr.mxu0 0.0
      %439 = vmatpush1.msra.mxu0 0.0
      %440 = vmatprep.subr.mxu0 0.0
      %441 = vmatpush1.msra.mxu0 0.0
      %442 = vmatprep.subr.mxu0 0.0
      %443 = vmatpush1.msra.mxu0 0.0
      %444 = vmatprep.subr.mxu0 0.0
      %445 = vmatpush1.msra.mxu0 0.0
      %446 = vmatprep.subr.mxu0 0.0
      %447 = vmatpush1.msra.mxu0 0.0
      %448 = vmatprep.subr.mxu0 0.0
      %449 = vmatpush1.msra.mxu0 0.0
      %450 = vmatprep.subr.mxu0 0.0
      %451 = vmatpush1.msra.mxu0 0.0
      %452 = vmatprep.subr.mxu0 0.0
      %453 = vmatpush1.msra.mxu0 0.0
      %454 = vmatprep.subr.mxu0 0.0
      %455 = vmatpush1.msra.mxu0 %v213
      %456 = vmatprep.subr.mxu0 0.0
      %457 = vmatpush1.msra.mxu0 %v212
      %458 = vmatprep.subr.mxu0 0.0
      %459 = vmatpush2.msra.mxu0 0.0
      %460 = vmatprep.subr.mxu0 0.0
      %461 = vmatpush2.msra.mxu0 0.0
      %462 = vmatprep.subr.mxu0 0.0
      %463 = vmatpush2.msra.mxu0 0.0
      %464 = vmatprep.subr.mxu0 0.0
      %465 = vmatpush2.msra.mxu0 0.0
      %466 = vmatprep.subr.mxu0 0.0
      %467 = vmatpush2.msra.mxu0 0.0
      %468 = vmatprep.subr.mxu0 0.0
      %469 = vmatpush2.msra.mxu0 0.0
      %470 = vmatprep.subr.mxu0 0.0
      %471 = vmatpush2.msra.mxu0 0.0
      %472 = vmatprep.subr.mxu0 0.0
      %473 = vmatpush2.msra.mxu0 0.0
      %474 = vmatprep.subr.mxu0 0.0
      %475 = vmatpush2.msra.mxu0 0.0
      %476 = vmatprep.subr.mxu0 0.0
      %477 = vmatpush2.msra.mxu0 0.0
      %478 = vmatprep.subr.mxu0 0.0
      %479 = vmatpush2.msra.mxu0 0.0
      %480 = vmatprep.subr.mxu0 0.0
      %481 = vmatpush2.msra.mxu0 0.0
      %482 = vmatprep.subr.mxu0 0.0
      %483 = vmatpush2.msra.mxu0 0.0
      %484 = vmatprep.subr.mxu0 0.0
      %485 = vmatpush2.msra.mxu0 0.0
      %486 = vmatprep.subr.mxu0 0.0
      %487 = vmatpush2.msra.mxu0 0.0
      %488 = vmatprep.subr.mxu0 0.0
      %489 = vmatpush2.msra.mxu0 0.0
      %490 = vmatprep.mubr.f32.mxu0 0.0
      %491 = vmatmul.mubr.f32.gmra.mxu0 %v421
      %v492 = vpop.f32.mrf.mxu0
      %v493 = vadd.f32 0.0, %v492
      %v494 = vpop.f32.mrf.mxu0
      %495 = vmatprep.mubr.f32.mxu0 0.0
      %496 = vmatmul.mubr.f32.gmra.mxu0 %v424
      %v497 = vpop.f32.mrf.mxu0
      %v498 = vadd.f32 0.0, %v497
      %v499 = vpop.f32.mrf.mxu0
      %500 = vdwg.mxu0
      %v501 = vmul.f32 %v212, %v493
      %v502 = vmul.f32 %v213, %v498
      %v503 = vadd.f32 %v501, %v502
      %v504 = vrot.slane %v503, 4
      %v505 = vadd.f32 %v503, %v504
      %v506 = vrot.slane %v505, 2
      %v507 = vadd.f32 %v505, %v506
      %v508 = vrot.slane %v507, 1
      %v509 = vadd.f32 %v507, %v508
      %v510 = vand.u32 2147483647, %v509
      %511 = vadd.xlane.f32.xlu0 %v510
      %v512 = vpop.xlane.xlu0 %511
      %v513 = vadd.f32 %v413, %v512
      %v514 = vmul.f32 %v513, 0.0009765625
      %vm515 = vcmask 0
      %516 = vst.msk [vmem:[#allocation4] sm:$0x1] %vm515, %v514
    $region17: #{_run.1} parent=1 // pred_fallthru
      _
    // Predicated region
    $region18: #{_run.1} parent=1 // pred_check
      _
    $region19: #{_run.1} parent=1 // pred_check_branch
      %518 = sbr.rel (0) target = $region21
    $region20: #{_run.1} parent=1 // pred_region
      %s520 = ssub.s32 16, 16
      %521 = vsyncadd [#allocation5], %s520
      %s523 = sshll.u32 [#allocation4], 4
      %s524 = int_to_ptr.vmem [resolvable:$true] %s523
      %526 = dma.vmem_to_hbm [thread:$0]  %s524, 16, %s2, [#allocation5]
    $region21: #{_run.1} parent=1 // pred_fallthru
      _
    // Predicated region
    $region22: #{_run.1} parent=1 // pred_check
      _
    $region23: #{_run.1} parent=1 // pred_check_branch
      %528 = sbr.rel (0) target = $region25
    $region24: #{_run.1} parent=1 // pred_region
      %529 = dma.done [#allocation5], 16
    $region25: #{_run.1} parent=1 // pred_fallthru
      _
    %530 = vsyncpa [#allocation5], 1

</llo_original>
